<compile_context>
chip_gen: v7x
topology: tpu7x:2x2x1
jax: 0.10.0
libtpu: 0.0.40
codegen_flags: <defaults>
</compile_context>

<pallas_src>
import functools

import jax
import jax.numpy as jnp
from jax import lax
from jax.experimental import pallas as pl
from jax.experimental.pallas import tpu as pltpu

EPS = 1e-12   # torch.nn.functional.normalize default eps
LANE = 128    # TPU vreg lane width


def _l2_normalize(x):
    # x / max(||x||_2, EPS)  ==  x * rsqrt(max(||x||^2, EPS^2))   (EUP rsqrt)
    n2 = jnp.sum(x * x, axis=-1, keepdims=True)
    return x * lax.rsqrt(jnp.maximum(n2, EPS * EPS))


def _stage_kernel(a_ref, h_ref, w_ref, b_ref, o_ref, *,
                  num_blocks, skip_every, has_l2norm):
    """Fused GNNSkipStage forward (skipsum) over all layers of all blocks."""
    a = a_ref[...]                       # (N, N)    bf16  -- loaded once
    b_all = b_ref[...]                   # (L, 1, D) f32   -- hoisted once
    h = h_ref[...]                       # (N, D)    f32

    layer = 0
    for _ in range(num_blocks):
        h0 = h                                          # skip input (VMEM/vregs)
        for _ in range(skip_every):
            # message passing:  A_hat @ H               (MXU, bf16 in / f32 acc)
            agg = jnp.dot(a, h.astype(jnp.bfloat16),
                          preferred_element_type=jnp.float32)
            # linear transform: (.) @ W + b             (MXU + VPU)
            z = jnp.dot(agg.astype(jnp.bfloat16), w_ref[layer],
                        preferred_element_type=jnp.float32)
            z = z + b_all[layer]
            # GeneralLayer post-layer: no BN, dropout p=0 -> ReLU -> L2 norm
            z = jnp.maximum(z, 0.0)
            z = _l2_normalize(z)
            h = z
            layer += 1
        # GNNSkipBlock: skipsum + block activation
        h = jnp.maximum(h + h0, 0.0)

    if has_l2norm:                       # GNNSkipStage final F.normalize
        h = _l2_normalize(h)
    o_ref[...] = h.astype(o_ref.dtype)


def gnn_skip_stage_forward(a, h, params, has_l2norm=True):
    """GNNSkipStage.forward with stage_type='skipsum' as one fused Pallas call."""
    num_blocks = len(params)
    skip_every = len(params[0])
    num_layers = num_blocks * skip_every
    n, dim_in = h.shape
    dim_out = params[0][0][0].shape[1]
    assert dim_in == dim_out, "Sum skip must have same dim_in, dim_out"
    d_pad = ((max(dim_out, 1) + LANE - 1) // LANE) * LANE   # lane-dense width

    # Stack & zero-pad every layer's parameters to the lane-dense width.
    w_stk, b_stk = [], []
    for block in params:
        for (w, bias) in block:
            wp = jnp.zeros((d_pad, d_pad), jnp.float32)
            wp = wp.at[:w.shape[0], :w.shape[1]].set(w)
            bp = jnp.zeros((1, d_pad), jnp.float32)
            bp = bp.at[0, :bias.shape[0]].set(bias)
            w_stk.append(wp)
            b_stk.append(bp)
    w_stk = jnp.stack(w_stk).astype(jnp.bfloat16)            # (L, d_pad, d_pad)
    b_stk = jnp.stack(b_stk)                                  # (L, 1, d_pad) f32
    h_pad = jnp.zeros((n, d_pad), jnp.float32).at[:, :dim_in].set(h)
    a_bf16 = a.astype(jnp.bfloat16)

    kernel = functools.partial(
        _stage_kernel, num_blocks=num_blocks, skip_every=skip_every,
        has_l2norm=has_l2norm)

    out = pl.pallas_call(
        kernel,
        out_shape=jax.ShapeDtypeStruct((n, d_pad), jnp.float32),
        grid=(1,),
        # Full-array blocks: entire working set (<0.5 MiB) lives in VMEM for
        # the whole stage; block shapes equal the full array dims so the
        # (8, 128) rule is satisfied, and the output last dim is 128-dense.
        in_specs=[
            pl.BlockSpec((n, n), lambda i: (0, 0)),                        # A_hat (bf16)
            pl.BlockSpec((n, d_pad), lambda i: (0, 0)),                    # H (padded)
            pl.BlockSpec((num_layers, d_pad, d_pad), lambda i: (0, 0, 0)), # W stacked (bf16)
            pl.BlockSpec((num_layers, 1, d_pad), lambda i: (0, 0, 0)),     # b stacked
        ],
        out_specs=pl.BlockSpec((n, d_pad), lambda i: (0, 0)),
        compiler_params=pltpu.CompilerParams(
            dimension_semantics=("arbitrary",)),
    )(a_bf16, h_pad, w_stk, b_stk)
    return out[:, :dim_out]


def init_stage_params(key, dim_in, dim_out, num_layers, skip_every):
    """Deterministic glorot-uniform-ish init for every GCN layer."""
    assert num_layers % skip_every == 0
    num_blocks = num_layers // skip_every
    params = []
    for b in range(num_blocks):
        block = []
        for l in range(skip_every):
            d_in = dim_in if (b == 0 and l == 0) else dim_out
            key, kw, kb = jax.random.split(key, 3)
            lim = (6.0 / (d_in + dim_out)) ** 0.5
            w = jax.random.uniform(kw, (d_in, dim_out), jnp.float32, -lim, lim)
            bias = jax.random.uniform(kb, (dim_out,), jnp.float32, -0.1, 0.1)
            block.append((w, bias))
        params.append(block)
    return params


def reference_forward(a, h, params, has_l2norm=True):
    """Pure-JAX f32 reference mirroring the PyTorch module exactly."""
    for block in params:
        h0 = h
        for w, bias in block:
            z = a @ h @ w + bias           # GCN conv
            z = jnp.maximum(z, 0.0)        # act (ReLU); no BN, dropout p=0
            z = _l2_normalize(z)           # per-layer has_l2norm
            h = z
        h = jnp.maximum(h + h0, 0.0)       # skipsum + block act
    if has_l2norm:
        h = _l2_normalize(h)               # stage-level F.normalize
    return h


if __name__ == "__main__":
    N, DIM_IN, DIM_OUT = 64, 32, 32
    NUM_LAYERS, SKIP_EVERY = 4, 2   # -> 2 skip blocks of 2 GNN layers each

    key = jax.random.PRNGKey(0)
    key, ka, kx, kp = jax.random.split(key, 4)

    # Deterministic random graph -> symmetrically-normalized dense adjacency.
    adj = (jax.random.uniform(ka, (N, N)) < 0.1).astype(jnp.float32)
    adj = jnp.minimum(jnp.maximum(adj, adj.T) + jnp.eye(N, dtype=jnp.float32), 1.0)
    d_inv_sqrt = 1.0 / jnp.sqrt(adj.sum(axis=-1))
    a_hat = adj * d_inv_sqrt[:, None] * d_inv_sqrt[None, :]

    x = jax.random.normal(kx, (N, DIM_IN), jnp.float32)
    params = init_stage_params(kp, DIM_IN, DIM_OUT, NUM_LAYERS, SKIP_EVERY)

    out = gnn_skip_stage_forward(a_hat, x, params, has_l2norm=True)
    out = jax.block_until_ready(out)

    ref = reference_forward(a_hat, x, params, has_l2norm=True)
    assert out.shape == (N, DIM_OUT)
    # bf16 MXU inputs with f32 accumulation: compare at bf16-level tolerance.
    assert jnp.allclose(out, ref, atol=3e-2, rtol=3e-2), "mismatch vs reference"

    # TODO(synk): dropout>0 / BatchNorm (has_bn=True) and stage_type='skipconcat'
    # variants are not implemented (would need PRNG / running-stats / growing-dim
    # plumbing inside the fused kernel).
    print("KERNEL_OK")
</pallas_src>

<mosaic_0001>
module attributes {stable_mosaic.version = 11 : i64} {
  func.func @_stage_kernel(%arg0: i32, %arg1: memref<64x64xbf16, #tpu.memory_space<vmem>>, %arg2: memref<64x128xf32, #tpu.memory_space<vmem>>, %arg3: memref<4x128x128xbf16, #tpu.memory_space<vmem>>, %arg4: memref<4x1x128xf32, #tpu.memory_space<vmem>>, %arg5: memref<64x128xf32, #tpu.memory_space<vmem>>) attributes {dimension_semantics = [#tpu.dimension_semantics<arbitrary>], iteration_bounds = array<i64: 1>, scalar_prefetch = 0 : i64, scratch_operands = 0 : i64, tpu.core_type = #tpu.core_type<tc>, window_params = [{pipeline_mode = #tpu.pipeline_mode<synchronous>, transform_indices = @transform_0, window_bounds = array<i64: 64, 64>}, {pipeline_mode = #tpu.pipeline_mode<synchronous>, transform_indices = @transform_1, window_bounds = array<i64: 64, 128>}, {pipeline_mode = #tpu.pipeline_mode<synchronous>, transform_indices = @transform_2, window_bounds = array<i64: 4, 128, 128>}, {pipeline_mode = #tpu.pipeline_mode<synchronous>, transform_indices = @transform_3, window_bounds = array<i64: 4, 1, 128>}, {pipeline_mode = #tpu.pipeline_mode<synchronous>, transform_indices = @transform_4, window_bounds = array<i64: 64, 128>}]} {
    %c0 = arith.constant 0 : index
    %c0_0 = arith.constant 0 : index
    %0 = vector.load %arg1[%c0, %c0_0] : memref<64x64xbf16, #tpu.memory_space<vmem>>, vector<64x64xbf16>
    %c0_1 = arith.constant 0 : index
    %c0_2 = arith.constant 0 : index
    %c0_3 = arith.constant 0 : index
    %1 = vector.load %arg4[%c0_1, %c0_2, %c0_3] : memref<4x1x128xf32, #tpu.memory_space<vmem>>, vector<4x1x128xf32>
    %c0_4 = arith.constant 0 : index
    %c0_5 = arith.constant 0 : index
    %2 = vector.load %arg2[%c0_4, %c0_5] : memref<64x128xf32, #tpu.memory_space<vmem>>, vector<64x128xf32>
    %3 = arith.truncf %2 : vector<64x128xf32> to vector<64x128xbf16>
    %cst = arith.constant dense<0.000000e+00> : vector<64x128xf32>
    %4 = tpu.matmul %0, %3, %cst {dimension_numbers = #tpu.dot_dimension_numbers<[1], [0], [0], [1], [0, 0, 1, 1], [], []>} : vector<64x64xbf16>, vector<64x128xbf16>, vector<64x128xf32> -> vector<64x128xf32>
    %5 = arith.truncf %4 : vector<64x128xf32> to vector<64x128xbf16>
    %c0_6 = arith.constant 0 : index
    %c0_7 = arith.constant 0 : index
    %c0_8 = arith.constant 0 : index
    %6 = vector.load %arg3[%c0_6, %c0_7, %c0_8] : memref<4x128x128xbf16, #tpu.memory_space<vmem>>, vector<1x128x128xbf16>
    %7 = vector.shape_cast %6 : vector<1x128x128xbf16> to vector<128x128xbf16>
    %cst_9 = arith.constant dense<0.000000e+00> : vector<64x128xf32>
    %8 = tpu.matmul %5, %7, %cst_9 {dimension_numbers = #tpu.dot_dimension_numbers<[1], [0], [0], [1], [0, 0, 1, 1], [], []>} : vector<64x128xbf16>, vector<128x128xbf16>, vector<64x128xf32> -> vector<64x128xf32>
    %9 = vector.extract_strided_slice %1 {offsets = [0, 0, 0], sizes = [1, 1, 128], strides = [1, 1, 1]} : vector<4x1x128xf32> to vector<1x1x128xf32>
    %10 = vector.shape_cast %9 : vector<1x1x128xf32> to vector<1x128xf32>
    %11 = vector.broadcast %10 : vector<1x128xf32> to vector<64x128xf32>
    %12 = arith.addf %8, %11 : vector<64x128xf32>
    %cst_10 = arith.constant 0.000000e+00 : f32
    %13 = vector.broadcast %cst_10 : f32 to vector<64x128xf32>
    %14 = arith.maximumf %12, %13 : vector<64x128xf32>
    %15 = arith.mulf %14, %14 : vector<64x128xf32>
    %cst_11 = arith.constant dense<0.000000e+00> : vector<64xf32>
    %16 = vector.multi_reduction <add>, %15, %cst_11 [1] : vector<64x128xf32> to vector<64xf32>
    %17 = vector.shape_cast %16 : vector<64xf32> to vector<64x1xf32>
    %cst_12 = arith.constant 1.000000e-24 : f32
    %18 = vector.broadcast %cst_12 : f32 to vector<64x1xf32>
    %19 = arith.maximumf %17, %18 : vector<64x1xf32>
    %20 = math.rsqrt %19 : vector<64x1xf32>
    %21 = vector.broadcast %20 : vector<64x1xf32> to vector<64x128xf32>
    %22 = arith.mulf %14, %21 : vector<64x128xf32>
    %23 = arith.truncf %22 : vector<64x128xf32> to vector<64x128xbf16>
    %cst_13 = arith.constant dense<0.000000e+00> : vector<64x128xf32>
    %24 = tpu.matmul %0, %23, %cst_13 {dimension_numbers = #tpu.dot_dimension_numbers<[1], [0], [0], [1], [0, 0, 1, 1], [], []>} : vector<64x64xbf16>, vector<64x128xbf16>, vector<64x128xf32> -> vector<64x128xf32>
    %25 = arith.truncf %24 : vector<64x128xf32> to vector<64x128xbf16>
    %c1 = arith.constant 1 : index
    %c0_14 = arith.constant 0 : index
    %c0_15 = arith.constant 0 : index
    %26 = vector.load %arg3[%c1, %c0_14, %c0_15] : memref<4x128x128xbf16, #tpu.memory_space<vmem>>, vector<1x128x128xbf16>
    %27 = vector.shape_cast %26 : vector<1x128x128xbf16> to vector<128x128xbf16>
    %cst_16 = arith.constant dense<0.000000e+00> : vector<64x128xf32>
    %28 = tpu.matmul %25, %27, %cst_16 {dimension_numbers = #tpu.dot_dimension_numbers<[1], [0], [0], [1], [0, 0, 1, 1], [], []>} : vector<64x128xbf16>, vector<128x128xbf16>, vector<64x128xf32> -> vector<64x128xf32>
    %29 = vector.extract_strided_slice %1 {offsets = [1, 0, 0], sizes = [1, 1, 128], strides = [1, 1, 1]} : vector<4x1x128xf32> to vector<1x1x128xf32>
    %30 = vector.shape_cast %29 : vector<1x1x128xf32> to vector<1x128xf32>
    %31 = vector.broadcast %30 : vector<1x128xf32> to vector<64x128xf32>
    %32 = arith.addf %28, %31 : vector<64x128xf32>
    %cst_17 = arith.constant 0.000000e+00 : f32
    %33 = vector.broadcast %cst_17 : f32 to vector<64x128xf32>
    %34 = arith.maximumf %32, %33 : vector<64x128xf32>
    %35 = arith.mulf %34, %34 : vector<64x128xf32>
    %cst_18 = arith.constant dense<0.000000e+00> : vector<64xf32>
    %36 = vector.multi_reduction <add>, %35, %cst_18 [1] : vector<64x128xf32> to vector<64xf32>
    %37 = vector.shape_cast %36 : vector<64xf32> to vector<64x1xf32>
    %cst_19 = arith.constant 1.000000e-24 : f32
    %38 = vector.broadcast %cst_19 : f32 to vector<64x1xf32>
    %39 = arith.maximumf %37, %38 : vector<64x1xf32>
    %40 = math.rsqrt %39 : vector<64x1xf32>
    %41 = vector.broadcast %40 : vector<64x1xf32> to vector<64x128xf32>
    %42 = arith.mulf %34, %41 : vector<64x128xf32>
    %43 = arith.addf %42, %2 : vector<64x128xf32>
    %cst_20 = arith.constant 0.000000e+00 : f32
    %44 = vector.broadcast %cst_20 : f32 to vector<64x128xf32>
    %45 = arith.maximumf %43, %44 : vector<64x128xf32>
    %46 = arith.truncf %45 : vector<64x128xf32> to vector<64x128xbf16>
    %cst_21 = arith.constant dense<0.000000e+00> : vector<64x128xf32>
    %47 = tpu.matmul %0, %46, %cst_21 {dimension_numbers = #tpu.dot_dimension_numbers<[1], [0], [0], [1], [0, 0, 1, 1], [], []>} : vector<64x64xbf16>, vector<64x128xbf16>, vector<64x128xf32> -> vector<64x128xf32>
    %48 = arith.truncf %47 : vector<64x128xf32> to vector<64x128xbf16>
    %c2 = arith.constant 2 : index
    %c0_22 = arith.constant 0 : index
    %c0_23 = arith.constant 0 : index
    %49 = vector.load %arg3[%c2, %c0_22, %c0_23] : memref<4x128x128xbf16, #tpu.memory_space<vmem>>, vector<1x128x128xbf16>
    %50 = vector.shape_cast %49 : vector<1x128x128xbf16> to vector<128x128xbf16>
    %cst_24 = arith.constant dense<0.000000e+00> : vector<64x128xf32>
    %51 = tpu.matmul %48, %50, %cst_24 {dimension_numbers = #tpu.dot_dimension_numbers<[1], [0], [0], [1], [0, 0, 1, 1], [], []>} : vector<64x128xbf16>, vector<128x128xbf16>, vector<64x128xf32> -> vector<64x128xf32>
    %52 = vector.extract_strided_slice %1 {offsets = [2, 0, 0], sizes = [1, 1, 128], strides = [1, 1, 1]} : vector<4x1x128xf32> to vector<1x1x128xf32>
    %53 = vector.shape_cast %52 : vector<1x1x128xf32> to vector<1x128xf32>
    %54 = vector.broadcast %53 : vector<1x128xf32> to vector<64x128xf32>
    %55 = arith.addf %51, %54 : vector<64x128xf32>
    %cst_25 = arith.constant 0.000000e+00 : f32
    %56 = vector.broadcast %cst_25 : f32 to vector<64x128xf32>
    %57 = arith.maximumf %55, %56 : vector<64x128xf32>
    %58 = arith.mulf %57, %57 : vector<64x128xf32>
    %cst_26 = arith.constant dense<0.000000e+00> : vector<64xf32>
    %59 = vector.multi_reduction <add>, %58, %cst_26 [1] : vector<64x128xf32> to vector<64xf32>
    %60 = vector.shape_cast %59 : vector<64xf32> to vector<64x1xf32>
    %cst_27 = arith.constant 1.000000e-24 : f32
    %61 = vector.broadcast %cst_27 : f32 to vector<64x1xf32>
    %62 = arith.maximumf %60, %61 : vector<64x1xf32>
    %63 = math.rsqrt %62 : vector<64x1xf32>
    %64 = vector.broadcast %63 : vector<64x1xf32> to vector<64x128xf32>
    %65 = arith.mulf %57, %64 : vector<64x128xf32>
    %66 = arith.truncf %65 : vector<64x128xf32> to vector<64x128xbf16>
    %cst_28 = arith.constant dense<0.000000e+00> : vector<64x128xf32>
    %67 = tpu.matmul %0, %66, %cst_28 {dimension_numbers = #tpu.dot_dimension_numbers<[1], [0], [0], [1], [0, 0, 1, 1], [], []>} : vector<64x64xbf16>, vector<64x128xbf16>, vector<64x128xf32> -> vector<64x128xf32>
    %68 = arith.truncf %67 : vector<64x128xf32> to vector<64x128xbf16>
    %c3 = arith.constant 3 : index
    %c0_29 = arith.constant 0 : index
    %c0_30 = arith.constant 0 : index
    %69 = vector.load %arg3[%c3, %c0_29, %c0_30] : memref<4x128x128xbf16, #tpu.memory_space<vmem>>, vector<1x128x128xbf16>
    %70 = vector.shape_cast %69 : vector<1x128x128xbf16> to vector<128x128xbf16>
    %cst_31 = arith.constant dense<0.000000e+00> : vector<64x128xf32>
    %71 = tpu.matmul %68, %70, %cst_31 {dimension_numbers = #tpu.dot_dimension_numbers<[1], [0], [0], [1], [0, 0, 1, 1], [], []>} : vector<64x128xbf16>, vector<128x128xbf16>, vector<64x128xf32> -> vector<64x128xf32>
    %72 = vector.extract_strided_slice %1 {offsets = [3, 0, 0], sizes = [1, 1, 128], strides = [1, 1, 1]} : vector<4x1x128xf32> to vector<1x1x128xf32>
    %73 = vector.shape_cast %72 : vector<1x1x128xf32> to vector<1x128xf32>
    %74 = vector.broadcast %73 : vector<1x128xf32> to vector<64x128xf32>
    %75 = arith.addf %71, %74 : vector<64x128xf32>
    %cst_32 = arith.constant 0.000000e+00 : f32
    %76 = vector.broadcast %cst_32 : f32 to vector<64x128xf32>
    %77 = arith.maximumf %75, %76 : vector<64x128xf32>
    %78 = arith.mulf %77, %77 : vector<64x128xf32>
    %cst_33 = arith.constant dense<0.000000e+00> : vector<64xf32>
    %79 = vector.multi_reduction <add>, %78, %cst_33 [1] : vector<64x128xf32> to vector<64xf32>
    %80 = vector.shape_cast %79 : vector<64xf32> to vector<64x1xf32>
    %cst_34 = arith.constant 1.000000e-24 : f32
    %81 = vector.broadcast %cst_34 : f32 to vector<64x1xf32>
    %82 = arith.maximumf %80, %81 : vector<64x1xf32>
    %83 = math.rsqrt %82 : vector<64x1xf32>
    %84 = vector.broadcast %83 : vector<64x1xf32> to vector<64x128xf32>
    %85 = arith.mulf %77, %84 : vector<64x128xf32>
    %86 = arith.addf %85, %45 : vector<64x128xf32>
    %cst_35 = arith.constant 0.000000e+00 : f32
    %87 = vector.broadcast %cst_35 : f32 to vector<64x128xf32>
    %88 = arith.maximumf %86, %87 : vector<64x128xf32>
    %89 = arith.mulf %88, %88 : vector<64x128xf32>
    %cst_36 = arith.constant dense<0.000000e+00> : vector<64xf32>
    %90 = vector.multi_reduction <add>, %89, %cst_36 [1] : vector<64x128xf32> to vector<64xf32>
    %91 = vector.shape_cast %90 : vector<64xf32> to vector<64x1xf32>
    %cst_37 = arith.constant 1.000000e-24 : f32
    %92 = vector.broadcast %cst_37 : f32 to vector<64x1xf32>
    %93 = arith.maximumf %91, %92 : vector<64x1xf32>
    %94 = math.rsqrt %93 : vector<64x1xf32>
    %95 = vector.broadcast %94 : vector<64x1xf32> to vector<64x128xf32>
    %96 = arith.mulf %88, %95 : vector<64x128xf32>
    %c0_38 = arith.constant 0 : index
    %c0_39 = arith.constant 0 : index
    %97 = vector.load %arg5[%c0_38, %c0_39] : memref<64x128xf32, #tpu.memory_space<vmem>>, vector<64x128xf32>
    tpu.vector_store %arg5[%c0_38, %c0_39], %96 {strides = array<i32>} : memref<64x128xf32, #tpu.memory_space<vmem>>, vector<64x128xf32>,
    return
  }
  func.func @transform_0(%arg0: i32) -> (i32, i32) {
    %c0_i32 = arith.constant 0 : i32
    %c0_i32_0 = arith.constant 0 : i32
    %c0_i32_1 = arith.constant 0 : i32
    return %c0_i32, %c0_i32_0 : i32, i32
  }
  func.func @transform_1(%arg0: i32) -> (i32, i32) {
    %c0_i32 = arith.constant 0 : i32
    %c0_i32_0 = arith.constant 0 : i32
    %c0_i32_1 = arith.constant 0 : i32
    return %c0_i32, %c0_i32_0 : i32, i32
  }
  func.func @transform_2(%arg0: i32) -> (i32, i32, i32) {
    %c0_i32 = arith.constant 0 : i32
    %c0_i32_0 = arith.constant 0 : i32
    %c0_i32_1 = arith.constant 0 : i32
    %c0_i32_2 = arith.constant 0 : i32
    return %c0_i32, %c0_i32_0, %c0_i32_1 : i32, i32, i32
  }
  func.func @transform_3(%arg0: i32) -> (i32, i32, i32) {
    %c0_i32 = arith.constant 0 : i32
    %c0_i32_0 = arith.constant 0 : i32
    %c0_i32_1 = arith.constant 0 : i32
    %c0_i32_2 = arith.constant 0 : i32
    return %c0_i32, %c0_i32_0, %c0_i32_1 : i32, i32, i32
  }
  func.func @transform_4(%arg0: i32) -> (i32, i32) {
    %c0_i32 = arith.constant 0 : i32
    %c0_i32_0 = arith.constant 0 : i32
    %c0_i32_1 = arith.constant 0 : i32
    return %c0_i32, %c0_i32_0 : i32, i32
  }
}

</mosaic_0001>

<llo_original>
// kernel: tpu_custom_call.1
$region0: #{tpu_custom_call.1}
  #allocation0 [shape = 'u32[]', space=smem, size = 0x4, offset = 0x4, fixed_abs, tag = 'smem constant byte address 0x4 - core index']
  #allocation1 [shape = 'u32[144,128]{1,0:T(1,128)}', space=vmem, size = 0x12000, scoped, tag = 'internal scratch']
  %s0 = inlined_call_operand.hbm [shape: bf16[64,64], index: 0, kind: input, shape index: {}]
  %s1 = inlined_call_operand.hbm [shape: f32[64,128], index: 1, kind: input, shape index: {}]
  %s2 = inlined_call_operand.hbm [shape: bf16[4,128,128], index: 2, kind: input, shape index: {}]
  %s3 = inlined_call_operand.vmem [shape: f32[4,1,128], index: 3, kind: input, shape index: {}]
  %s4 = inlined_call_operand.hbm [shape: f32[64,128], index: 4, kind: output, shape index: {}]
  %s5 = sld [smem:[#allocation0]]
  $region38: #{tpu_custom_call.1} parent=0
    _
  %s7 = ssub.s32 1, %s5
  %s8 = scalar_select 0, %s7, %s5
  $region1: #{tpu_custom_call.1} parent=0
    #allocation2 [shape = 'u8[16384]{0}', space=vmem, size = 0x4000, scoped, tag = 'input window, operand 0, single buffered']
    #allocation3 [shape = 's32[1]{0}', space=sflag, size = 0x4, scoped, tag = 'scoped memory for tpu_custom_call.1']
    #allocation4 [shape = 's32[1]{0}', space=sflag, size = 0x4, scoped, tag = 'scoped memory for tpu_custom_call.1']
    #allocation5 [shape = 'u8[32768]{0}', space=vmem, size = 0x8000, scoped, tag = 'input window, operand 1, single buffered']
    #allocation6 [shape = 's32[1]{0}', space=sflag, size = 0x4, scoped, tag = 'scoped memory for tpu_custom_call.1']
    #allocation7 [shape = 'u8[131072]{0}', space=vmem, size = 0x20000, scoped, tag = 'input window, operand 2, single buffered']
    #allocation8 [shape = 'u8[32768]{0}', space=vmem, size = 0x8000, scoped, tag = 'output window, operand 0, single buffered']
    %9 = vsyncpa [#allocation3], 0
    %10 = vsyncpa [#allocation6], 0
    %11 = vsyncpa [#allocation4], 0
    // Predicated region
    $region2: #{tpu_custom_call.1} parent=1 // pred_check
      _
    $region3: #{tpu_custom_call.1} parent=1 // pred_check_branch
      %13 = sbr.rel (0) target = $region5
    $region4: #{tpu_custom_call.1} parent=1 // pred_region
      %s15 = ssub.s32 512, 512
      %16 = vsyncadd [#allocation3], %s15
      %s17 = sshll.u32 [#allocation2], 4
      %s18 = int_to_ptr.vmem [resolvable:$true] %s17
      %23 = dma.hbm_to_vmem [thread:$0]  %s0, 512, %s18, [#allocation3], 64, 64, 4
    $region5: #{tpu_custom_call.1} parent=1 // pred_fallthru
      _
    // Predicated region
    $region6: #{tpu_custom_call.1} parent=1 // pred_check
      _
    $region7: #{tpu_custom_call.1} parent=1 // pred_check_branch
      %25 = sbr.rel (0) target = $region9
    $region8: #{tpu_custom_call.1} parent=1 // pred_region
      %s27 = ssub.s32 1024, 1024
      %28 = vsyncadd [#allocation6], %s27
      %s29 = sshll.u32 [#allocation5], 4
      %s30 = int_to_ptr.vmem [resolvable:$true] %s29
      %35 = dma.hbm_to_vmem [thread:$0]  %s1, 1024, %s30, [#allocation6], 128, 128, 8
    $region9: #{tpu_custom_call.1} parent=1 // pred_fallthru
      _
    // Predicated region
    $region10: #{tpu_custom_call.1} parent=1 // pred_check
      _
    $region11: #{tpu_custom_call.1} parent=1 // pred_check_branch
      %37 = sbr.rel (0) target = $region13
    $region12: #{tpu_custom_call.1} parent=1 // pred_region
      %s39 = ssub.s32 4096, 4096
      %40 = vsyncadd [#allocation6], %s39
      %s41 = sshll.u32 [#allocation7], 4
      %s42 = int_to_ptr.vmem [resolvable:$true] %s41
      %47 = dma.hbm_to_vmem [thread:$0]  %s2, 4096, %s42, [#allocation6], 64, 64, 4
    $region13: #{tpu_custom_call.1} parent=1 // pred_fallthru
      _
    // Predicated region
    $region14: #{tpu_custom_call.1} parent=1 // pred_check
      _
    $region15: #{tpu_custom_call.1} parent=1 // pred_check_branch
      %49 = sbr.rel (0) target = $region17
    $region16: #{tpu_custom_call.1} parent=1 // pred_region
      _
    $region17: #{tpu_custom_call.1} parent=1 // pred_fallthru
      _
    // Predicated region
    $region18: #{tpu_custom_call.1} parent=1 // pred_check
      _
    $region19: #{tpu_custom_call.1} parent=1 // pred_check_branch
      %51 = sbr.rel (0) target = $region21
    $region20: #{tpu_custom_call.1} parent=1 // pred_region
      %52 = dma.done [#allocation3], 512
    $region21: #{tpu_custom_call.1} parent=1 // pred_fallthru
      _
    // Predicated region
    $region22: #{tpu_custom_call.1} parent=1 // pred_check
      _
    $region23: #{tpu_custom_call.1} parent=1 // pred_check_branch
      %54 = sbr.rel (0) target = $region25
    $region24: #{tpu_custom_call.1} parent=1 // pred_region
      %55 = dma.done [#allocation6], 1024
    $region25: #{tpu_custom_call.1} parent=1 // pred_fallthru
      _
    // Predicated region
    $region26: #{tpu_custom_call.1} parent=1 // pred_check
      _
    $region27: #{tpu_custom_call.1} parent=1 // pred_check_branch
      %57 = sbr.rel (0) target = $region29
    $region28: #{tpu_custom_call.1} parent=1 // pred_region
      %58 = dma.done [#allocation6], 4096
    $region29: #{tpu_custom_call.1} parent=1 // pred_fallthru
      _
    %v60 = vld [vmem:[#allocation2] sm:$0xf]
    %v61 = vld [vmem:[#allocation2 + $0x4] sm:$0xf]
    %v62 = vld [vmem:[#allocation2 + $0x8] sm:$0xf]
    %v63 = vld [vmem:[#allocation2 + $0xc] sm:$0xf]
    %v64 = vld [vmem:[#allocation2 + $0x10] sm:$0xf]
    %v65 = vld [vmem:[#allocation2 + $0x14] sm:$0xf]
    %v66 = vld [vmem:[#allocation2 + $0x18] sm:$0xf]
    %v67 = vld [vmem:[#allocation2 + $0x1c] sm:$0xf]
    %v68 = vld [vmem:[%s3] sm:$0x1]
    %v69 = vld [vmem:[%s3 + $0x1] sm:$0x1]
    %v70 = vld [vmem:[%s3 + $0x2] sm:$0x1]
    %v71 = vld [vmem:[%s3 + $0x3] sm:$0x1]
    %v72 = vld [vmem:[#allocation5] sm:$0xff]
    %v73 = vld [vmem:[#allocation5 + $0x8] sm:$0xff]
    %v74 = vld [vmem:[#allocation5 + $0x10] sm:$0xff]
    %v75 = vld [vmem:[#allocation5 + $0x18] sm:$0xff]
    %v76 = vld [vmem:[#allocation5 + $0x20] sm:$0xff]
    %v77 = vld [vmem:[#allocation5 + $0x28] sm:$0xff]
    %v78 = vld [vmem:[#allocation5 + $0x30] sm:$0xff]
    %v79 = vld [vmem:[#allocation5 + $0x38] sm:$0xff]
    %v80 = vpack.c.bf16 %v73, %v72
    %v81 = vpack.c.bf16 %v75, %v74
    %v82 = vpack.c.bf16 %v77, %v76
    %v83 = vpack.c.bf16 %v79, %v78
    %v92 = vunpack.c.l.b16 %v60
    %v93 = vunpack.c.l.b16 %v61
    %v94 = vunpack.c.l.b16 %v62
    %v95 = vunpack.c.l.b16 %v63
    %v96 = vunpack.c.l.b16 %v64
    %v97 = vunpack.c.l.b16 %v65
    %v98 = vunpack.c.l.b16 %v66
    %v99 = vunpack.c.l.b16 %v67
    %v100 = vpack.c.b16 %v93, %v92
    %v101 = vpack.c.b16 %v95, %v94
    %v102 = vpack.c.b16 %v97, %v96
    %v103 = vpack.c.b16 %v99, %v98
    %vm104 = vcmask 523264
    %v106 = vsel %vm104, %v100, 0
    %v109 = vsel %vm104, %v101, 0
    %v112 = vsel %vm104, %v102, 0
    %v115 = vsel %vm104, %v103, 0
    %117 = vmatprep.subr.bf16.mxu0 0
    %118 = vmatpush1.bf16.msra.mxu0 %v80
    %119 = vmatprep.subr.bf16.mxu0 0
    %120 = vmatpush1.bf16.msra.mxu0 %v81
    %121 = vmatprep.subr.bf16.mxu0 0
    %122 = vmatpush1.bf16.msra.mxu0 %v82
    %123 = vmatprep.subr.bf16.mxu0 0
    %124 = vmatpush1.bf16.msra.mxu0 %v83
    %125 = vmatprep.subr.bf16.mxu0 0
    %126 = vmatpush1.bf16.msra.mxu0 0
    %127 = vmatprep.subr.bf16.mxu0 0
    %128 = vmatpush1.bf16.msra.mxu0 0
    %129 = vmatprep.subr.bf16.mxu0 0
    %130 = vmatpush1.bf16.msra.mxu0 0
    %131 = vmatprep.subr.bf16.mxu0 0
    %132 = vmatpush1.bf16.msra.mxu0 0
    %133 = vmatprep.subr.bf16.mxu0 0
    %134 = vmatpush1.bf16.msra.mxu0 0
    %135 = vmatprep.subr.bf16.mxu0 0
    %136 = vmatpush1.bf16.msra.mxu0 0
    %137 = vmatprep.subr.bf16.mxu0 0
    %138 = vmatpush1.bf16.msra.mxu0 0
    %139 = vmatprep.subr.bf16.mxu0 0
    %140 = vmatpush1.bf16.msra.mxu0 0
    %141 = vmatprep.subr.bf16.mxu0 0
    %142 = vmatpush1.bf16.msra.mxu0 0
    %143 = vmatprep.subr.bf16.mxu0 0
    %144 = vmatpush1.bf16.msra.mxu0 0
    %145 = vmatprep.subr.bf16.mxu0 0
    %146 = vmatpush1.bf16.msra.mxu0 0
    %147 = vmatprep.subr.bf16.mxu0 0
    %148 = vmatpush1.bf16.msra.mxu0 0
    %149 = vmatprep.mubr.bf16.mxu0 0
    %150 = vmatmul.mubr.bf16.gmra.mrb[0].mxu0 %v106
    %v151 = vpop.f32.mrb[0].mxu0
    %v152 = vadd.f32 0.0, %v151
    %v153 = vpop.f32.mrb[0].mxu0
    %v154 = vpop.f32.mrb[0].mxu0
    %v155 = vadd.f32 0.0, %v154
    %v156 = vpop.f32.mrb[0].mxu0
    %157 = vmatprep.mubr.bf16.mxu0 0
    %158 = vmatmul.mubr.bf16.gmra.mrb[0].mxu0 %v109
    %v159 = vpop.f32.mrb[0].mxu0
    %v160 = vadd.f32 0.0, %v159
    %v161 = vpop.f32.mrb[0].mxu0
    %v162 = vpop.f32.mrb[0].mxu0
    %v163 = vadd.f32 0.0, %v162
    %v164 = vpop.f32.mrb[0].mxu0
    %165 = vmatprep.mubr.bf16.mxu0 0
    %166 = vmatmul.mubr.bf16.gmra.mrb[0].mxu0 %v112
    %v167 = vpop.f32.mrb[0].mxu0
    %v168 = vadd.f32 0.0, %v167
    %v169 = vpop.f32.mrb[0].mxu0
    %v170 = vpop.f32.mrb[0].mxu0
    %v171 = vadd.f32 0.0, %v170
    %v172 = vpop.f32.mrb[0].mxu0
    %173 = vmatprep.mubr.bf16.mxu0 0
    %174 = vmatmul.mubr.bf16.gmra.mrb[0].mxu0 %v115
    %v175 = vpop.f32.mrb[0].mxu0
    %v176 = vadd.f32 0.0, %v175
    %v177 = vpop.f32.mrb[0].mxu0
    %v178 = vpop.f32.mrb[0].mxu0
    %v179 = vadd.f32 0.0, %v178
    %v180 = vpop.f32.mrb[0].mxu0
    %181 = vdwg.mxu0
    %v182 = vpack.c.bf16 %v155, %v152
    %v183 = vpack.c.bf16 %v163, %v160
    %v184 = vpack.c.bf16 %v171, %v168
    %v185 = vpack.c.bf16 %v179, %v176
    %v186 = vld [vmem:[#allocation7] sm:$0xf]
    %v187 = vld [vmem:[#allocation7 + $0x4] sm:$0xf]
    %v188 = vld [vmem:[#allocation7 + $0x8] sm:$0xf]
    %v189 = vld [vmem:[#allocation7 + $0xc] sm:$0xf]
    %v190 = vld [vmem:[#allocation7 + $0x10] sm:$0xf]
    %v191 = vld [vmem:[#allocation7 + $0x14] sm:$0xf]
    %v192 = vld [vmem:[#allocation7 + $0x18] sm:$0xf]
    %v193 = vld [vmem:[#allocation7 + $0x1c] sm:$0xf]
    %v194 = vld [vmem:[#allocation7 + $0x20] sm:$0xf]
    %v195 = vld [vmem:[#allocation7 + $0x24] sm:$0xf]
    %v196 = vld [vmem:[#allocation7 + $0x28] sm:$0xf]
    %v197 = vld [vmem:[#allocation7 + $0x2c] sm:$0xf]
    %v198 = vld [vmem:[#allocation7 + $0x30] sm:$0xf]
    %v199 = vld [vmem:[#allocation7 + $0x34] sm:$0xf]
    %v200 = vld [vmem:[#allocation7 + $0x38] sm:$0xf]
    %v201 = vld [vmem:[#allocation7 + $0x3c] sm:$0xf]
    %v203 = vlaneseq
    %v204 = vshrl.u32 %v203, 7
    %v205 = vsub.s32 0, %v204
    %v206 = vrot.slane %v68, %v205
    %v224 = vunpack.c.l.b16 %v186
    %v225 = vunpack.c.l.b16 %v187
    %v226 = vunpack.c.l.b16 %v188
    %v227 = vunpack.c.l.b16 %v189
    %v228 = vunpack.c.l.b16 %v190
    %v229 = vunpack.c.l.b16 %v191
    %v230 = vunpack.c.l.b16 %v192
    %v231 = vunpack.c.l.b16 %v193
    %v232 = vunpack.c.l.b16 %v194
    %v233 = vunpack.c.l.b16 %v195
    %v234 = vunpack.c.l.b16 %v196
    %v235 = vunpack.c.l.b16 %v197
    %v236 = vunpack.c.l.b16 %v198
    %v237 = vunpack.c.l.b16 %v199
    %v238 = vunpack.c.l.b16 %v200
    %v239 = vunpack.c.l.b16 %v201
    %v240 = vpack.c.b16 %v225, %v224
    %v241 = vpack.c.b16 %v227, %v226
    %v242 = vpack.c.b16 %v229, %v228
    %v243 = vpack.c.b16 %v231, %v230
    %v244 = vpack.c.b16 %v233, %v232
    %v245 = vpack.c.b16 %v235, %v234
    %v246 = vpack.c.b16 %v237, %v236
    %v247 = vpack.c.b16 %v239, %v238
    %256 = vmatprep.subr.bf16.mxu0 0
    %257 = vmatpush1.bf16.msra.mxu0 %v240
    %258 = vmatprep.subr.bf16.mxu0 0
    %259 = vmatpush1.bf16.msra.mxu0 %v241
    %260 = vmatprep.subr.bf16.mxu0 0
    %261 = vmatpush1.bf16.msra.mxu0 %v242
    %262 = vmatprep.subr.bf16.mxu0 0
    %263 = vmatpush1.bf16.msra.mxu0 %v243
    %264 = vmatprep.subr.bf16.mxu0 0
    %265 = vmatpush1.bf16.msra.mxu0 %v244
    %266 = vmatprep.subr.bf16.mxu0 0
    %267 = vmatpush1.bf16.msra.mxu0 %v245
    %268 = vmatprep.subr.bf16.mxu0 0
    %269 = vmatpush1.bf16.msra.mxu0 %v246
    %270 = vmatprep.subr.bf16.mxu0 0
    %271 = vmatpush1.bf16.msra.mxu0 %v247
    %272 = vmatprep.subr.bf16.mxu0 0
    %273 = vmatpush1.bf16.msra.mxu0 0
    %274 = vmatprep.subr.bf16.mxu0 0
    %275 = vmatpush1.bf16.msra.mxu0 0
    %276 = vmatprep.subr.bf16.mxu0 0
    %277 = vmatpush1.bf16.msra.mxu0 0
    %278 = vmatprep.subr.bf16.mxu0 0
    %279 = vmatpush1.bf16.msra.mxu0 0
    %280 = vmatprep.subr.bf16.mxu0 0
    %281 = vmatpush1.bf16.msra.mxu0 0
    %282 = vmatprep.subr.bf16.mxu0 0
    %283 = vmatpush1.bf16.msra.mxu0 0
    %284 = vmatprep.subr.bf16.mxu0 0
    %285 = vmatpush1.bf16.msra.mxu0 0
    %286 = vmatprep.subr.bf16.mxu0 0
    %287 = vmatpush1.bf16.msra.mxu0 0
    %288 = vmatprep.mubr.bf16.mxu0 0
    %289 = vmatmul.mubr.bf16.gmra.mrb[0].mxu0 %v182
    %v290 = vpop.f32.mrb[0].mxu0
    %v291 = vadd.f32 %v206, %v290
    %v292 = vpop.f32.mrb[0].mxu0
    %v293 = vpop.f32.mrb[0].mxu0
    %v294 = vadd.f32 %v206, %v293
    %v295 = vpop.f32.mrb[0].mxu0
    %296 = vmatprep.mubr.bf16.mxu0 0
    %297 = vmatmul.mubr.bf16.gmra.mrb[0].mxu0 %v183
    %v298 = vpop.f32.mrb[0].mxu0
    %v299 = vadd.f32 %v206, %v298
    %v300 = vpop.f32.mrb[0].mxu0
    %v301 = vpop.f32.mrb[0].mxu0
    %v302 = vadd.f32 %v206, %v301
    %v303 = vpop.f32.mrb[0].mxu0
    %304 = vmatprep.mubr.bf16.mxu0 0
    %305 = vmatmul.mubr.bf16.gmra.mrb[0].mxu0 %v184
    %v306 = vpop.f32.mrb[0].mxu0
    %v307 = vadd.f32 %v206, %v306
    %v308 = vpop.f32.mrb[0].mxu0
    %v309 = vpop.f32.mrb[0].mxu0
    %v310 = vadd.f32 %v206, %v309
    %v311 = vpop.f32.mrb[0].mxu0
    %312 = vmatprep.mubr.bf16.mxu0 0
    %313 = vmatmul.mubr.bf16.gmra.mrb[0].mxu0 %v185
    %v314 = vpop.f32.mrb[0].mxu0
    %v315 = vadd.f32 %v206, %v314
    %v316 = vpop.f32.mrb[0].mxu0
    %v317 = vpop.f32.mrb[0].mxu0
    %v318 = vadd.f32 %v206, %v317
    %v319 = vpop.f32.mrb[0].mxu0
    %320 = vdwg.mxu0
    %v321 = vmax.f32 %v291, 0.0
    %v322 = vmax.f32 %v294, 0.0
    %v323 = vmax.f32 %v299, 0.0
    %v324 = vmax.f32 %v302, 0.0
    %v325 = vmax.f32 %v307, 0.0
    %v326 = vmax.f32 %v310, 0.0
    %v327 = vmax.f32 %v315, 0.0
    %v328 = vmax.f32 %v318, 0.0
    %v329 = vmul.f32 %v321, %v321
    %v330 = vmul.f32 %v322, %v322
    %v331 = vmul.f32 %v323, %v323
    %v332 = vmul.f32 %v324, %v324
    %v333 = vmul.f32 %v325, %v325
    %v334 = vmul.f32 %v326, %v326
    %v335 = vmul.f32 %v327, %v327
    %v336 = vmul.f32 %v328, %v328
    %337 = vadd.xlane.f32.xlu0 %v329
    %v338 = vpop.xlane.xlu0 %337
    %339 = vadd.xlane.f32.xlu0 %v330
    %v340 = vpop.xlane.xlu0 %339
    %341 = vadd.xlane.f32.xlu0 %v331
    %v342 = vpop.xlane.xlu0 %341
    %343 = vadd.xlane.f32.xlu0 %v332
    %v344 = vpop.xlane.xlu0 %343
    %345 = vadd.xlane.f32.xlu0 %v333
    %v346 = vpop.xlane.xlu0 %345
    %347 = vadd.xlane.f32.xlu0 %v334
    %v348 = vpop.xlane.xlu0 %347
    %349 = vadd.xlane.f32.xlu0 %v335
    %v350 = vpop.xlane.xlu0 %349
    %351 = vadd.xlane.f32.xlu0 %v336
    %v352 = vpop.xlane.xlu0 %351
    %v353 = vmax.f32 %v338, 1e-24
    %v354 = vmax.f32 %v340, 1e-24
    %v355 = vmax.f32 %v342, 1e-24
    %v356 = vmax.f32 %v344, 1e-24
    %v357 = vmax.f32 %v346, 1e-24
    %v358 = vmax.f32 %v348, 1e-24
    %v359 = vmax.f32 %v350, 1e-24
    %v360 = vmax.f32 %v352, 1e-24
    %v361 = vrsqrt.pop %v353
    %v362 = vrsqrt.pop %v354
    %v363 = vrsqrt.pop %v355
    %v364 = vrsqrt.pop %v356
    %v365 = vrsqrt.pop %v357
    %v366 = vrsqrt.pop %v358
    %v367 = vrsqrt.pop %v359
    %v368 = vrsqrt.pop %v360
    %v369 = vmul.f32 %v321, %v361
    %v370 = vmul.f32 %v322, %v362
    %v371 = vmul.f32 %v323, %v363
    %v372 = vmul.f32 %v324, %v364
    %v373 = vmul.f32 %v325, %v365
    %v374 = vmul.f32 %v326, %v366
    %v375 = vmul.f32 %v327, %v367
    %v376 = vmul.f32 %v328, %v368
    %v377 = vpack.c.bf16 %v370, %v369
    %v378 = vpack.c.bf16 %v372, %v371
    %v379 = vpack.c.bf16 %v374, %v373
    %v380 = vpack.c.bf16 %v376, %v375
    %381 = vmatprep.subr.bf16.mxu0 0
    %382 = vmatpush1.bf16.msra.mxu0 %v377
    %383 = vmatprep.subr.bf16.mxu0 0
    %384 = vmatpush1.bf16.msra.mxu0 %v378
    %385 = vmatprep.subr.bf16.mxu0 0
    %386 = vmatpush1.bf16.msra.mxu0 %v379
    %387 = vmatprep.subr.bf16.mxu0 0
    %388 = vmatpush1.bf16.msra.mxu0 %v380
    %389 = vmatprep.subr.bf16.mxu0 0
    %390 = vmatpush1.bf16.msra.mxu0 0
    %391 = vmatprep.subr.bf16.mxu0 0
    %392 = vmatpush1.bf16.msra.mxu0 0
    %393 = vmatprep.subr.bf16.mxu0 0
    %394 = vmatpush1.bf16.msra.mxu0 0
    %395 = vmatprep.subr.bf16.mxu0 0
    %396 = vmatpush1.bf16.msra.mxu0 0
    %397 = vmatprep.subr.bf16.mxu0 0
    %398 = vmatpush1.bf16.msra.mxu0 0
    %399 = vmatprep.subr.bf16.mxu0 0
    %400 = vmatpush1.bf16.msra.mxu0 0
    %401 = vmatprep.subr.bf16.mxu0 0
    %402 = vmatpush1.bf16.msra.mxu0 0
    %403 = vmatprep.subr.bf16.mxu0 0
    %404 = vmatpush1.bf16.msra.mxu0 0
    %405 = vmatprep.subr.bf16.mxu0 0
    %406 = vmatpush1.bf16.msra.mxu0 0
    %407 = vmatprep.subr.bf16.mxu0 0
    %408 = vmatpush1.bf16.msra.mxu0 0
    %409 = vmatprep.subr.bf16.mxu0 0
    %410 = vmatpush1.bf16.msra.mxu0 0
    %411 = vmatprep.subr.bf16.mxu0 0
    %412 = vmatpush1.bf16.msra.mxu0 0
    %413 = vmatprep.mubr.bf16.mxu0 0
    %414 = vmatmul.mubr.bf16.gmra.mrb[0].mxu0 %v106
    %v415 = vpop.f32.mrb[0].mxu0
    %v416 = vadd.f32 0.0, %v415
    %v417 = vpop.f32.mrb[0].mxu0
    %v418 = vpop.f32.mrb[0].mxu0
    %v419 = vadd.f32 0.0, %v418
    %v420 = vpop.f32.mrb[0].mxu0
    %421 = vmatprep.mubr.bf16.mxu0 0
    %422 = vmatmul.mubr.bf16.gmra.mrb[0].mxu0 %v109
    %v423 = vpop.f32.mrb[0].mxu0
    %v424 = vadd.f32 0.0, %v423
    %v425 = vpop.f32.mrb[0].mxu0
    %v426 = vpop.f32.mrb[0].mxu0
    %v427 = vadd.f32 0.0, %v426
    %v428 = vpop.f32.mrb[0].mxu0
    %429 = vmatprep.mubr.bf16.mxu0 0
    %430 = vmatmul.mubr.bf16.gmra.mrb[0].mxu0 %v112
    %v431 = vpop.f32.mrb[0].mxu0
    %v432 = vadd.f32 0.0, %v431
    %v433 = vpop.f32.mrb[0].mxu0
    %v434 = vpop.f32.mrb[0].mxu0
    %v435 = vadd.f32 0.0, %v434
    %v436 = vpop.f32.mrb[0].mxu0
    %437 = vmatprep.mubr.bf16.mxu0 0
    %438 = vmatmul.mubr.bf16.gmra.mrb[0].mxu0 %v115
    %v439 = vpop.f32.mrb[0].mxu0
    %v440 = vadd.f32 0.0, %v439
    %v441 = vpop.f32.mrb[0].mxu0
    %v442 = vpop.f32.mrb[0].mxu0
    %v443 = vadd.f32 0.0, %v442
    %v444 = vpop.f32.mrb[0].mxu0
    %445 = vdwg.mxu0
    %v446 = vpack.c.bf16 %v419, %v416
    %v447 = vpack.c.bf16 %v427, %v424
    %v448 = vpack.c.bf16 %v435, %v432
    %v449 = vpack.c.bf16 %v443, %v440
    %s450 = scalar_lea.vmem [#allocation7], 64
    %v451 = vld [vmem:[%s450] sm:$0xf]
    %v452 = vld [vmem:[%s450 + $0x4] sm:$0xf]
    %v453 = vld [vmem:[%s450 + $0x8] sm:$0xf]
    %v454 = vld [vmem:[%s450 + $0xc] sm:$0xf]
    %v455 = vld [vmem:[%s450 + $0x10] sm:$0xf]
    %v456 = vld [vmem:[%s450 + $0x14] sm:$0xf]
    %v457 = vld [vmem:[%s450 + $0x18] sm:$0xf]
    %v458 = vld [vmem:[%s450 + $0x1c] sm:$0xf]
    %v459 = vld [vmem:[%s450 + $0x20] sm:$0xf]
    %v460 = vld [vmem:[%s450 + $0x24] sm:$0xf]
    %v461 = vld [vmem:[%s450 + $0x28] sm:$0xf]
    %v462 = vld [vmem:[%s450 + $0x2c] sm:$0xf]
    %v463 = vld [vmem:[%s450 + $0x30] sm:$0xf]
    %v464 = vld [vmem:[%s450 + $0x34] sm:$0xf]
    %v465 = vld [vmem:[%s450 + $0x38] sm:$0xf]
    %v466 = vld [vmem:[%s450 + $0x3c] sm:$0xf]
    %v468 = vlaneseq
    %v469 = vshrl.u32 %v468, 7
    %v470 = vsub.s32 0, %v469
    %v471 = vrot.slane %v69, %v470
    %v489 = vunpack.c.l.b16 %v451
    %v490 = vunpack.c.l.b16 %v452
    %v491 = vunpack.c.l.b16 %v453
    %v492 = vunpack.c.l.b16 %v454
    %v493 = vunpack.c.l.b16 %v455
    %v494 = vunpack.c.l.b16 %v456
    %v495 = vunpack.c.l.b16 %v457
    %v496 = vunpack.c.l.b16 %v458
    %v497 = vunpack.c.l.b16 %v459
    %v498 = vunpack.c.l.b16 %v460
    %v499 = vunpack.c.l.b16 %v461
    %v500 = vunpack.c.l.b16 %v462
    %v501 = vunpack.c.l.b16 %v463
    %v502 = vunpack.c.l.b16 %v464
    %v503 = vunpack.c.l.b16 %v465
    %v504 = vunpack.c.l.b16 %v466
    %v505 = vpack.c.b16 %v490, %v489
    %v506 = vpack.c.b16 %v492, %v491
    %v507 = vpack.c.b16 %v494, %v493
    %v508 = vpack.c.b16 %v496, %v495
    %v509 = vpack.c.b16 %v498, %v497
    %v510 = vpack.c.b16 %v500, %v499
    %v511 = vpack.c.b16 %v502, %v501
    %v512 = vpack.c.b16 %v504, %v503
    %521 = vmatprep.subr.bf16.mxu0 0
    %522 = vmatpush1.bf16.msra.mxu0 %v505
    %523 = vmatprep.subr.bf16.mxu0 0
    %524 = vmatpush1.bf16.msra.mxu0 %v506
    %525 = vmatprep.subr.bf16.mxu0 0
    %526 = vmatpush1.bf16.msra.mxu0 %v507
    %527 = vmatprep.subr.bf16.mxu0 0
    %528 = vmatpush1.bf16.msra.mxu0 %v508
    %529 = vmatprep.subr.bf16.mxu0 0
    %530 = vmatpush1.bf16.msra.mxu0 %v509
    %531 = vmatprep.subr.bf16.mxu0 0
    %532 = vmatpush1.bf16.msra.mxu0 %v510
    %533 = vmatprep.subr.bf16.mxu0 0
    %534 = vmatpush1.bf16.msra.mxu0 %v511
    %535 = vmatprep.subr.bf16.mxu0 0
    %536 = vmatpush1.bf16.msra.mxu0 %v512
    %537 = vmatprep.subr.bf16.mxu0 0
    %538 = vmatpush1.bf16.msra.mxu0 0
    %539 = vmatprep.subr.bf16.mxu0 0
    %540 = vmatpush1.bf16.msra.mxu0 0
    %541 = vmatprep.subr.bf16.mxu0 0
    %542 = vmatpush1.bf16.msra.mxu0 0
    %543 = vmatprep.subr.bf16.mxu0 0
    %544 = vmatpush1.bf16.msra.mxu0 0
    %545 = vmatprep.subr.bf16.mxu0 0
    %546 = vmatpush1.bf16.msra.mxu0 0
    %547 = vmatprep.subr.bf16.mxu0 0
    %548 = vmatpush1.bf16.msra.mxu0 0
    %549 = vmatprep.subr.bf16.mxu0 0
    %550 = vmatpush1.bf16.msra.mxu0 0
    %551 = vmatprep.subr.bf16.mxu0 0
    %552 = vmatpush1.bf16.msra.mxu0 0
    %553 = vmatprep.mubr.bf16.mxu0 0
    %554 = vmatmul.mubr.bf16.gmra.mrb[0].mxu0 %v446
    %v555 = vpop.f32.mrb[0].mxu0
    %v556 = vadd.f32 %v471, %v555
    %v557 = vpop.f32.mrb[0].mxu0
    %v558 = vpop.f32.mrb[0].mxu0
    %v559 = vadd.f32 %v471, %v558
    %v560 = vpop.f32.mrb[0].mxu0
    %561 = vmatprep.mubr.bf16.mxu0 0
    %562 = vmatmul.mubr.bf16.gmra.mrb[0].mxu0 %v447
    %v563 = vpop.f32.mrb[0].mxu0
    %v564 = vadd.f32 %v471, %v563
    %v565 = vpop.f32.mrb[0].mxu0
    %v566 = vpop.f32.mrb[0].mxu0
    %v567 = vadd.f32 %v471, %v566
    %v568 = vpop.f32.mrb[0].mxu0
    %569 = vmatprep.mubr.bf16.mxu0 0
    %570 = vmatmul.mubr.bf16.gmra.mrb[0].mxu0 %v448
    %v571 = vpop.f32.mrb[0].mxu0
    %v572 = vadd.f32 %v471, %v571
    %v573 = vpop.f32.mrb[0].mxu0
    %v574 = vpop.f32.mrb[0].mxu0
    %v575 = vadd.f32 %v471, %v574
    %v576 = vpop.f32.mrb[0].mxu0
    %577 = vmatprep.mubr.bf16.mxu0 0
    %578 = vmatmul.mubr.bf16.gmra.mrb[0].mxu0 %v449
    %v579 = vpop.f32.mrb[0].mxu0
    %v580 = vadd.f32 %v471, %v579
    %v581 = vpop.f32.mrb[0].mxu0
    %v582 = vpop.f32.mrb[0].mxu0
    %v583 = vadd.f32 %v471, %v582
    %v584 = vpop.f32.mrb[0].mxu0
    %585 = vdwg.mxu0
    %v586 = vmax.f32 %v556, 0.0
    %v587 = vmax.f32 %v559, 0.0
    %v588 = vmax.f32 %v564, 0.0
    %v589 = vmax.f32 %v567, 0.0
    %v590 = vmax.f32 %v572, 0.0
    %v591 = vmax.f32 %v575, 0.0
    %v592 = vmax.f32 %v580, 0.0
    %v593 = vmax.f32 %v583, 0.0
    %v594 = vmul.f32 %v586, %v586
    %v595 = vmul.f32 %v587, %v587
    %v596 = vmul.f32 %v588, %v588
    %v597 = vmul.f32 %v589, %v589
    %v598 = vmul.f32 %v590, %v590
    %v599 = vmul.f32 %v591, %v591
    %v600 = vmul.f32 %v592, %v592
    %v601 = vmul.f32 %v593, %v593
    %602 = vadd.xlane.f32.xlu0 %v594
    %v603 = vpop.xlane.xlu0 %602
    %604 = vadd.xlane.f32.xlu0 %v595
    %v605 = vpop.xlane.xlu0 %604
    %606 = vadd.xlane.f32.xlu0 %v596
    %v607 = vpop.xlane.xlu0 %606
    %608 = vadd.xlane.f32.xlu0 %v597
    %v609 = vpop.xlane.xlu0 %608
    %610 = vadd.xlane.f32.xlu0 %v598
    %v611 = vpop.xlane.xlu0 %610
    %612 = vadd.xlane.f32.xlu0 %v599
    %v613 = vpop.xlane.xlu0 %612
    %614 = vadd.xlane.f32.xlu0 %v600
    %v615 = vpop.xlane.xlu0 %614
    %616 = vadd.xlane.f32.xlu0 %v601
    %v617 = vpop.xlane.xlu0 %616
    %v618 = vmax.f32 %v603, 1e-24
    %v619 = vmax.f32 %v605, 1e-24
    %v620 = vmax.f32 %v607, 1e-24
    %v621 = vmax.f32 %v609, 1e-24
    %v622 = vmax.f32 %v611, 1e-24
    %v623 = vmax.f32 %v613, 1e-24
    %v624 = vmax.f32 %v615, 1e-24
    %v625 = vmax.f32 %v617, 1e-24
    %v626 = vrsqrt.pop %v618
    %v627 = vrsqrt.pop %v619
    %v628 = vrsqrt.pop %v620
    %v629 = vrsqrt.pop %v621
    %v630 = vrsqrt.pop %v622
    %v631 = vrsqrt.pop %v623
    %v632 = vrsqrt.pop %v624
    %v633 = vrsqrt.pop %v625
    %v634 = vmul.f32 %v586, %v626
    %v635 = vmul.f32 %v587, %v627
    %v636 = vmul.f32 %v588, %v628
    %v637 = vmul.f32 %v589, %v629
    %v638 = vmul.f32 %v590, %v630
    %v639 = vmul.f32 %v591, %v631
    %v640 = vmul.f32 %v592, %v632
    %v641 = vmul.f32 %v593, %v633
    %v642 = vadd.f32 %v634, %v72
    %v643 = vadd.f32 %v635, %v73
    %v644 = vadd.f32 %v636, %v74
    %v645 = vadd.f32 %v637, %v75
    %v646 = vadd.f32 %v638, %v76
    %v647 = vadd.f32 %v639, %v77
    %v648 = vadd.f32 %v640, %v78
    %v649 = vadd.f32 %v641, %v79
    %v650 = vmax.f32 %v642, 0.0
    %v651 = vmax.f32 %v643, 0.0
    %v652 = vmax.f32 %v644, 0.0
    %v653 = vmax.f32 %v645, 0.0
    %v654 = vmax.f32 %v646, 0.0
    %v655 = vmax.f32 %v647, 0.0
    %v656 = vmax.f32 %v648, 0.0
    %v657 = vmax.f32 %v649, 0.0
    %v658 = vpack.c.bf16 %v651, %v650
    %v659 = vpack.c.bf16 %v653, %v652
    %v660 = vpack.c.bf16 %v655, %v654
    %v661 = vpack.c.bf16 %v657, %v656
    %662 = vmatprep.subr.bf16.mxu0 0
    %663 = vmatpush1.bf16.msra.mxu0 %v658
    %664 = vmatprep.subr.bf16.mxu0 0
    %665 = vmatpush1.bf16.msra.mxu0 %v659
    %666 = vmatprep.subr.bf16.mxu0 0
    %667 = vmatpush1.bf16.msra.mxu0 %v660
    %668 = vmatprep.subr.bf16.mxu0 0
    %669 = vmatpush1.bf16.msra.mxu0 %v661
    %670 = vmatprep.subr.bf16.mxu0 0
    %671 = vmatpush1.bf16.msra.mxu0 0
    %672 = vmatprep.subr.bf16.mxu0 0
    %673 = vmatpush1.bf16.msra.mxu0 0
    %674 = vmatprep.subr.bf16.mxu0 0
    %675 = vmatpush1.bf16.msra.mxu0 0
    %676 = vmatprep.subr.bf16.mxu0 0
    %677 = vmatpush1.bf16.msra.mxu0 0
    %678 = vmatprep.subr.bf16.mxu0 0
    %679 = vmatpush1.bf16.msra.mxu0 0
    %680 = vmatprep.subr.bf16.mxu0 0
    %681 = vmatpush1.bf16.msra.mxu0 0
    %682 = vmatprep.subr.bf16.mxu0 0
    %683 = vmatpush1.bf16.msra.mxu0 0
    %684 = vmatprep.subr.bf16.mxu0 0
    %685 = vmatpush1.bf16.msra.mxu0 0
    %686 = vmatprep.subr.bf16.mxu0 0
    %687 = vmatpush1.bf16.msra.mxu0 0
    %688 = vmatprep.subr.bf16.mxu0 0
    %689 = vmatpush1.bf16.msra.mxu0 0
    %690 = vmatprep.subr.bf16.mxu0 0
    %691 = vmatpush1.bf16.msra.mxu0 0
    %692 = vmatprep.subr.bf16.mxu0 0
    %693 = vmatpush1.bf16.msra.mxu0 0
    %694 = vmatprep.mubr.bf16.mxu0 0
    %695 = vmatmul.mubr.bf16.gmra.mrb[0].mxu0 %v106
    %v696 = vpop.f32.mrb[0].mxu0
    %v697 = vadd.f32 0.0, %v696
    %v698 = vpop.f32.mrb[0].mxu0
    %v699 = vpop.f32.mrb[0].mxu0
    %v700 = vadd.f32 0.0, %v699
    %v701 = vpop.f32.mrb[0].mxu0
    %702 = vmatprep.mubr.bf16.mxu0 0
    %703 = vmatmul.mubr.bf16.gmra.mrb[0].mxu0 %v109
    %v704 = vpop.f32.mrb[0].mxu0
    %v705 = vadd.f32 0.0, %v704
    %v706 = vpop.f32.mrb[0].mxu0
    %v707 = vpop.f32.mrb[0].mxu0
    %v708 = vadd.f32 0.0, %v707
    %v709 = vpop.f32.mrb[0].mxu0
    %710 = vmatprep.mubr.bf16.mxu0 0
    %711 = vmatmul.mubr.bf16.gmra.mrb[0].mxu0 %v112
    %v712 = vpop.f32.mrb[0].mxu0
    %v713 = vadd.f32 0.0, %v712
    %v714 = vpop.f32.mrb[0].mxu0
    %v715 = vpop.f32.mrb[0].mxu0
    %v716 = vadd.f32 0.0, %v715
    %v717 = vpop.f32.mrb[0].mxu0
    %718 = vmatprep.mubr.bf16.mxu0 0
    %719 = vmatmul.mubr.bf16.gmra.mrb[0].mxu0 %v115
    %v720 = vpop.f32.mrb[0].mxu0
    %v721 = vadd.f32 0.0, %v720
    %v722 = vpop.f32.mrb[0].mxu0
    %v723 = vpop.f32.mrb[0].mxu0
    %v724 = vadd.f32 0.0, %v723
    %v725 = vpop.f32.mrb[0].mxu0
    %726 = vdwg.mxu0
    %v727 = vpack.c.bf16 %v700, %v697
    %v728 = vpack.c.bf16 %v708, %v705
    %v729 = vpack.c.bf16 %v716, %v713
    %v730 = vpack.c.bf16 %v724, %v721
    %s731 = scalar_lea.vmem [#allocation7], 128
    %v732 = vld [vmem:[%s731] sm:$0xf]
    %v733 = vld [vmem:[%s731 + $0x4] sm:$0xf]
    %v734 = vld [vmem:[%s731 + $0x8] sm:$0xf]
    %v735 = vld [vmem:[%s731 + $0xc] sm:$0xf]
    %v736 = vld [vmem:[%s731 + $0x10] sm:$0xf]
    %v737 = vld [vmem:[%s731 + $0x14] sm:$0xf]
    %v738 = vld [vmem:[%s731 + $0x18] sm:$0xf]
    %v739 = vld [vmem:[%s731 + $0x1c] sm:$0xf]
    %v740 = vld [vmem:[%s731 + $0x20] sm:$0xf]
    %v741 = vld [vmem:[%s731 + $0x24] sm:$0xf]
    %v742 = vld [vmem:[%s731 + $0x28] sm:$0xf]
    %v743 = vld [vmem:[%s731 + $0x2c] sm:$0xf]
    %v744 = vld [vmem:[%s731 + $0x30] sm:$0xf]
    %v745 = vld [vmem:[%s731 + $0x34] sm:$0xf]
    %v746 = vld [vmem:[%s731 + $0x38] sm:$0xf]
    %v747 = vld [vmem:[%s731 + $0x3c] sm:$0xf]
    %v749 = vlaneseq
    %v750 = vshrl.u32 %v749, 7
    %v751 = vsub.s32 0, %v750
    %v752 = vrot.slane %v70, %v751
    %v770 = vunpack.c.l.b16 %v732
    %v771 = vunpack.c.l.b16 %v733
    %v772 = vunpack.c.l.b16 %v734
    %v773 = vunpack.c.l.b16 %v735
    %v774 = vunpack.c.l.b16 %v736
    %v775 = vunpack.c.l.b16 %v737
    %v776 = vunpack.c.l.b16 %v738
    %v777 = vunpack.c.l.b16 %v739
    %v778 = vunpack.c.l.b16 %v740
    %v779 = vunpack.c.l.b16 %v741
    %v780 = vunpack.c.l.b16 %v742
    %v781 = vunpack.c.l.b16 %v743
    %v782 = vunpack.c.l.b16 %v744
    %v783 = vunpack.c.l.b16 %v745
    %v784 = vunpack.c.l.b16 %v746
    %v785 = vunpack.c.l.b16 %v747
    %v786 = vpack.c.b16 %v771, %v770
    %v787 = vpack.c.b16 %v773, %v772
    %v788 = vpack.c.b16 %v775, %v774
    %v789 = vpack.c.b16 %v777, %v776
    %v790 = vpack.c.b16 %v779, %v778
    %v791 = vpack.c.b16 %v781, %v780
    %v792 = vpack.c.b16 %v783, %v782
    %v793 = vpack.c.b16 %v785, %v784
    %802 = vmatprep.subr.bf16.mxu0 0
    %803 = vmatpush1.bf16.msra.mxu0 %v786
    %804 = vmatprep.subr.bf16.mxu0 0
    %805 = vmatpush1.bf16.msra.mxu0 %v787
    %806 = vmatprep.subr.bf16.mxu0 0
    %807 = vmatpush1.bf16.msra.mxu0 %v788
    %808 = vmatprep.subr.bf16.mxu0 0
    %809 = vmatpush1.bf16.msra.mxu0 %v789
    %810 = vmatprep.subr.bf16.mxu0 0
    %811 = vmatpush1.bf16.msra.mxu0 %v790
    %812 = vmatprep.subr.bf16.mxu0 0
    %813 = vmatpush1.bf16.msra.mxu0 %v791
    %814 = vmatprep.subr.bf16.mxu0 0
    %815 = vmatpush1.bf16.msra.mxu0 %v792
    %816 = vmatprep.subr.bf16.mxu0 0
    %817 = vmatpush1.bf16.msra.mxu0 %v793
    %818 = vmatprep.subr.bf16.mxu0 0
    %819 = vmatpush1.bf16.msra.mxu0 0
    %820 = vmatprep.subr.bf16.mxu0 0
    %821 = vmatpush1.bf16.msra.mxu0 0
    %822 = vmatprep.subr.bf16.mxu0 0
    %823 = vmatpush1.bf16.msra.mxu0 0
    %824 = vmatprep.subr.bf16.mxu0 0
    %825 = vmatpush1.bf16.msra.mxu0 0
    %826 = vmatprep.subr.bf16.mxu0 0
    %827 = vmatpush1.bf16.msra.mxu0 0
    %828 = vmatprep.subr.bf16.mxu0 0
    %829 = vmatpush1.bf16.msra.mxu0 0
    %830 = vmatprep.subr.bf16.mxu0 0
    %831 = vmatpush1.bf16.msra.mxu0 0
    %832 = vmatprep.subr.bf16.mxu0 0
    %833 = vmatpush1.bf16.msra.mxu0 0
    %834 = vmatprep.mubr.bf16.mxu0 0
    %835 = vmatmul.mubr.bf16.gmra.mrb[0].mxu0 %v727
    %v836 = vpop.f32.mrb[0].mxu0
    %v837 = vadd.f32 %v752, %v836
    %v838 = vpop.f32.mrb[0].mxu0
    %v839 = vpop.f32.mrb[0].mxu0
    %v840 = vadd.f32 %v752, %v839
    %v841 = vpop.f32.mrb[0].mxu0
    %842 = vmatprep.mubr.bf16.mxu0 0
    %843 = vmatmul.mubr.bf16.gmra.mrb[0].mxu0 %v728
    %v844 = vpop.f32.mrb[0].mxu0
    %v845 = vadd.f32 %v752, %v844
    %v846 = vpop.f32.mrb[0].mxu0
    %v847 = vpop.f32.mrb[0].mxu0
    %v848 = vadd.f32 %v752, %v847
    %v849 = vpop.f32.mrb[0].mxu0
    %850 = vmatprep.mubr.bf16.mxu0 0
    %851 = vmatmul.mubr.bf16.gmra.mrb[0].mxu0 %v729
    %v852 = vpop.f32.mrb[0].mxu0
    %v853 = vadd.f32 %v752, %v852
    %v854 = vpop.f32.mrb[0].mxu0
    %v855 = vpop.f32.mrb[0].mxu0
    %v856 = vadd.f32 %v752, %v855
    %v857 = vpop.f32.mrb[0].mxu0
    %858 = vmatprep.mubr.bf16.mxu0 0
    %859 = vmatmul.mubr.bf16.gmra.mrb[0].mxu0 %v730
    %v860 = vpop.f32.mrb[0].mxu0
    %v861 = vadd.f32 %v752, %v860
    %v862 = vpop.f32.mrb[0].mxu0
    %v863 = vpop.f32.mrb[0].mxu0
    %v864 = vadd.f32 %v752, %v863
    %v865 = vpop.f32.mrb[0].mxu0
    %866 = vdwg.mxu0
    %v867 = vmax.f32 %v837, 0.0
    %v868 = vmax.f32 %v840, 0.0
    %v869 = vmax.f32 %v845, 0.0
    %v870 = vmax.f32 %v848, 0.0
    %v871 = vmax.f32 %v853, 0.0
    %v872 = vmax.f32 %v856, 0.0
    %v873 = vmax.f32 %v861, 0.0
    %v874 = vmax.f32 %v864, 0.0
    %v875 = vmul.f32 %v867, %v867
    %v876 = vmul.f32 %v868, %v868
    %v877 = vmul.f32 %v869, %v869
    %v878 = vmul.f32 %v870, %v870
    %v879 = vmul.f32 %v871, %v871
    %v880 = vmul.f32 %v872, %v872
    %v881 = vmul.f32 %v873, %v873
    %v882 = vmul.f32 %v874, %v874
    %883 = vadd.xlane.f32.xlu0 %v875
    %v884 = vpop.xlane.xlu0 %883
    %885 = vadd.xlane.f32.xlu0 %v876
    %v886 = vpop.xlane.xlu0 %885
    %887 = vadd.xlane.f32.xlu0 %v877
    %v888 = vpop.xlane.xlu0 %887
    %889 = vadd.xlane.f32.xlu0 %v878
    %v890 = vpop.xlane.xlu0 %889
    %891 = vadd.xlane.f32.xlu0 %v879
    %v892 = vpop.xlane.xlu0 %891
    %893 = vadd.xlane.f32.xlu0 %v880
    %v894 = vpop.xlane.xlu0 %893
    %895 = vadd.xlane.f32.xlu0 %v881
    %v896 = vpop.xlane.xlu0 %895
    %897 = vadd.xlane.f32.xlu0 %v882
    %v898 = vpop.xlane.xlu0 %897
    %v899 = vmax.f32 %v884, 1e-24
    %v900 = vmax.f32 %v886, 1e-24
    %v901 = vmax.f32 %v888, 1e-24
    %v902 = vmax.f32 %v890, 1e-24
    %v903 = vmax.f32 %v892, 1e-24
    %v904 = vmax.f32 %v894, 1e-24
    %v905 = vmax.f32 %v896, 1e-24
    %v906 = vmax.f32 %v898, 1e-24
    %v907 = vrsqrt.pop %v899
    %v908 = vrsqrt.pop %v900
    %v909 = vrsqrt.pop %v901
    %v910 = vrsqrt.pop %v902
    %v911 = vrsqrt.pop %v903
    %v912 = vrsqrt.pop %v904
    %v913 = vrsqrt.pop %v905
    %v914 = vrsqrt.pop %v906
    %v915 = vmul.f32 %v867, %v907
    %v916 = vmul.f32 %v868, %v908
    %v917 = vmul.f32 %v869, %v909
    %v918 = vmul.f32 %v870, %v910
    %v919 = vmul.f32 %v871, %v911
    %v920 = vmul.f32 %v872, %v912
    %v921 = vmul.f32 %v873, %v913
    %v922 = vmul.f32 %v874, %v914
    %v923 = vpack.c.bf16 %v916, %v915
    %v924 = vpack.c.bf16 %v918, %v917
    %v925 = vpack.c.bf16 %v920, %v919
    %v926 = vpack.c.bf16 %v922, %v921
    %927 = vmatprep.subr.bf16.mxu0 0
    %928 = vmatpush1.bf16.msra.mxu0 %v923
    %929 = vmatprep.subr.bf16.mxu0 0
    %930 = vmatpush1.bf16.msra.mxu0 %v924
    %931 = vmatprep.subr.bf16.mxu0 0
    %932 = vmatpush1.bf16.msra.mxu0 %v925
    %933 = vmatprep.subr.bf16.mxu0 0
    %934 = vmatpush1.bf16.msra.mxu0 %v926
    %935 = vmatprep.subr.bf16.mxu0 0
    %936 = vmatpush1.bf16.msra.mxu0 0
    %937 = vmatprep.subr.bf16.mxu0 0
    %938 = vmatpush1.bf16.msra.mxu0 0
    %939 = vmatprep.subr.bf16.mxu0 0
    %940 = vmatpush1.bf16.msra.mxu0 0
    %941 = vmatprep.subr.bf16.mxu0 0
    %942 = vmatpush1.bf16.msra.mxu0 0
    %943 = vmatprep.subr.bf16.mxu0 0
    %944 = vmatpush1.bf16.msra.mxu0 0
    %945 = vmatprep.subr.bf16.mxu0 0
    %946 = vmatpush1.bf16.msra.mxu0 0
    %947 = vmatprep.subr.bf16.mxu0 0
    %948 = vmatpush1.bf16.msra.mxu0 0
    %949 = vmatprep.subr.bf16.mxu0 0
    %950 = vmatpush1.bf16.msra.mxu0 0
    %951 = vmatprep.subr.bf16.mxu0 0
    %952 = vmatpush1.bf16.msra.mxu0 0
    %953 = vmatprep.subr.bf16.mxu0 0
    %954 = vmatpush1.bf16.msra.mxu0 0
    %955 = vmatprep.subr.bf16.mxu0 0
    %956 = vmatpush1.bf16.msra.mxu0 0
    %957 = vmatprep.subr.bf16.mxu0 0
    %958 = vmatpush1.bf16.msra.mxu0 0
    %959 = vmatprep.mubr.bf16.mxu0 0
    %960 = vmatmul.mubr.bf16.gmra.mrb[0].mxu0 %v106
    %v961 = vpop.f32.mrb[0].mxu0
    %v962 = vadd.f32 0.0, %v961
    %v963 = vpop.f32.mrb[0].mxu0
    %v964 = vpop.f32.mrb[0].mxu0
    %v965 = vadd.f32 0.0, %v964
    %v966 = vpop.f32.mrb[0].mxu0
    %967 = vmatprep.mubr.bf16.mxu0 0
    %968 = vmatmul.mubr.bf16.gmra.mrb[0].mxu0 %v109
    %v969 = vpop.f32.mrb[0].mxu0
    %v970 = vadd.f32 0.0, %v969
    %v971 = vpop.f32.mrb[0].mxu0
    %v972 = vpop.f32.mrb[0].mxu0
    %v973 = vadd.f32 0.0, %v972
    %v974 = vpop.f32.mrb[0].mxu0
    %975 = vmatprep.mubr.bf16.mxu0 0
    %976 = vmatmul.mubr.bf16.gmra.mrb[0].mxu0 %v112
    %v977 = vpop.f32.mrb[0].mxu0
    %v978 = vadd.f32 0.0, %v977
    %v979 = vpop.f32.mrb[0].mxu0
    %v980 = vpop.f32.mrb[0].mxu0
    %v981 = vadd.f32 0.0, %v980
    %v982 = vpop.f32.mrb[0].mxu0
    %983 = vmatprep.mubr.bf16.mxu0 0
    %984 = vmatmul.mubr.bf16.gmra.mrb[0].mxu0 %v115
    %v985 = vpop.f32.mrb[0].mxu0
    %v986 = vadd.f32 0.0, %v985
    %v987 = vpop.f32.mrb[0].mxu0
    %v988 = vpop.f32.mrb[0].mxu0
    %v989 = vadd.f32 0.0, %v988
    %v990 = vpop.f32.mrb[0].mxu0
    %991 = vdwg.mxu0
    %v992 = vpack.c.bf16 %v965, %v962
    %v993 = vpack.c.bf16 %v973, %v970
    %v994 = vpack.c.bf16 %v981, %v978
    %v995 = vpack.c.bf16 %v989, %v986
    %s996 = scalar_lea.vmem [#allocation7], 192
    %v997 = vld [vmem:[%s996] sm:$0xf]
    %v998 = vld [vmem:[%s996 + $0x4] sm:$0xf]
    %v999 = vld [vmem:[%s996 + $0x8] sm:$0xf]
    %v1000 = vld [vmem:[%s996 + $0xc] sm:$0xf]
    %v1001 = vld [vmem:[%s996 + $0x10] sm:$0xf]
    %v1002 = vld [vmem:[%s996 + $0x14] sm:$0xf]
    %v1003 = vld [vmem:[%s996 + $0x18] sm:$0xf]
    %v1004 = vld [vmem:[%s996 + $0x1c] sm:$0xf]
    %v1005 = vld [vmem:[%s996 + $0x20] sm:$0xf]
    %v1006 = vld [vmem:[%s996 + $0x24] sm:$0xf]
    %v1007 = vld [vmem:[%s996 + $0x28] sm:$0xf]
    %v1008 = vld [vmem:[%s996 + $0x2c] sm:$0xf]
    %v1009 = vld [vmem:[%s996 + $0x30] sm:$0xf]
    %v1010 = vld [vmem:[%s996 + $0x34] sm:$0xf]
    %v1011 = vld [vmem:[%s996 + $0x38] sm:$0xf]
    %v1012 = vld [vmem:[%s996 + $0x3c] sm:$0xf]
    %v1014 = vlaneseq
    %v1015 = vshrl.u32 %v1014, 7
    %v1016 = vsub.s32 0, %v1015
    %v1017 = vrot.slane %v71, %v1016
    %v1035 = vunpack.c.l.b16 %v997
    %v1036 = vunpack.c.l.b16 %v998
    %v1037 = vunpack.c.l.b16 %v999
    %v1038 = vunpack.c.l.b16 %v1000
    %v1039 = vunpack.c.l.b16 %v1001
    %v1040 = vunpack.c.l.b16 %v1002
    %v1041 = vunpack.c.l.b16 %v1003
    %v1042 = vunpack.c.l.b16 %v1004
    %v1043 = vunpack.c.l.b16 %v1005
    %v1044 = vunpack.c.l.b16 %v1006
    %v1045 = vunpack.c.l.b16 %v1007
    %v1046 = vunpack.c.l.b16 %v1008
    %v1047 = vunpack.c.l.b16 %v1009
    %v1048 = vunpack.c.l.b16 %v1010
    %v1049 = vunpack.c.l.b16 %v1011
    %v1050 = vunpack.c.l.b16 %v1012
    %v1051 = vpack.c.b16 %v1036, %v1035
    %v1052 = vpack.c.b16 %v1038, %v1037
    %v1053 = vpack.c.b16 %v1040, %v1039
    %v1054 = vpack.c.b16 %v1042, %v1041
    %v1055 = vpack.c.b16 %v1044, %v1043
    %v1056 = vpack.c.b16 %v1046, %v1045
    %v1057 = vpack.c.b16 %v1048, %v1047
    %v1058 = vpack.c.b16 %v1050, %v1049
    %1067 = vmatprep.subr.bf16.mxu0 0
    %1068 = vmatpush1.bf16.msra.mxu0 %v1051
    %1069 = vmatprep.subr.bf16.mxu0 0
    %1070 = vmatpush1.bf16.msra.mxu0 %v1052
    %1071 = vmatprep.subr.bf16.mxu0 0
    %1072 = vmatpush1.bf16.msra.mxu0 %v1053
    %1073 = vmatprep.subr.bf16.mxu0 0
    %1074 = vmatpush1.bf16.msra.mxu0 %v1054
    %1075 = vmatprep.subr.bf16.mxu0 0
    %1076 = vmatpush1.bf16.msra.mxu0 %v1055
    %1077 = vmatprep.subr.bf16.mxu0 0
    %1078 = vmatpush1.bf16.msra.mxu0 %v1056
    %1079 = vmatprep.subr.bf16.mxu0 0
    %1080 = vmatpush1.bf16.msra.mxu0 %v1057
    %1081 = vmatprep.subr.bf16.mxu0 0
    %1082 = vmatpush1.bf16.msra.mxu0 %v1058
    %1083 = vmatprep.subr.bf16.mxu0 0
    %1084 = vmatpush1.bf16.msra.mxu0 0
    %1085 = vmatprep.subr.bf16.mxu0 0
    %1086 = vmatpush1.bf16.msra.mxu0 0
    %1087 = vmatprep.subr.bf16.mxu0 0
    %1088 = vmatpush1.bf16.msra.mxu0 0
    %1089 = vmatprep.subr.bf16.mxu0 0
    %1090 = vmatpush1.bf16.msra.mxu0 0
    %1091 = vmatprep.subr.bf16.mxu0 0
    %1092 = vmatpush1.bf16.msra.mxu0 0
    %1093 = vmatprep.subr.bf16.mxu0 0
    %1094 = vmatpush1.bf16.msra.mxu0 0
    %1095 = vmatprep.subr.bf16.mxu0 0
    %1096 = vmatpush1.bf16.msra.mxu0 0
    %1097 = vmatprep.subr.bf16.mxu0 0
    %1098 = vmatpush1.bf16.msra.mxu0 0
    %1099 = vmatprep.mubr.bf16.mxu0 0
    %1100 = vmatmul.mubr.bf16.gmra.mrb[0].mxu0 %v992
    %v1101 = vpop.f32.mrb[0].mxu0
    %v1102 = vadd.f32 %v1017, %v1101
    %v1103 = vpop.f32.mrb[0].mxu0
    %v1104 = vpop.f32.mrb[0].mxu0
    %v1105 = vadd.f32 %v1017, %v1104
    %v1106 = vpop.f32.mrb[0].mxu0
    %1107 = vmatprep.mubr.bf16.mxu0 0
    %1108 = vmatmul.mubr.bf16.gmra.mrb[0].mxu0 %v993
    %v1109 = vpop.f32.mrb[0].mxu0
    %v1110 = vadd.f32 %v1017, %v1109
    %v1111 = vpop.f32.mrb[0].mxu0
    %v1112 = vpop.f32.mrb[0].mxu0
    %v1113 = vadd.f32 %v1017, %v1112
    %v1114 = vpop.f32.mrb[0].mxu0
    %1115 = vmatprep.mubr.bf16.mxu0 0
    %1116 = vmatmul.mubr.bf16.gmra.mrb[0].mxu0 %v994
    %v1117 = vpop.f32.mrb[0].mxu0
    %v1118 = vadd.f32 %v1017, %v1117
    %v1119 = vpop.f32.mrb[0].mxu0
    %v1120 = vpop.f32.mrb[0].mxu0
    %v1121 = vadd.f32 %v1017, %v1120
    %v1122 = vpop.f32.mrb[0].mxu0
    %1123 = vmatprep.mubr.bf16.mxu0 0
    %1124 = vmatmul.mubr.bf16.gmra.mrb[0].mxu0 %v995
    %v1125 = vpop.f32.mrb[0].mxu0
    %v1126 = vadd.f32 %v1017, %v1125
    %v1127 = vpop.f32.mrb[0].mxu0
    %v1128 = vpop.f32.mrb[0].mxu0
    %v1129 = vadd.f32 %v1017, %v1128
    %v1130 = vpop.f32.mrb[0].mxu0
    %1131 = vdwg.mxu0
    %v1132 = vmax.f32 %v1102, 0.0
    %v1133 = vmax.f32 %v1105, 0.0
    %v1134 = vmax.f32 %v1110, 0.0
    %v1135 = vmax.f32 %v1113, 0.0
    %v1136 = vmax.f32 %v1118, 0.0
    %v1137 = vmax.f32 %v1121, 0.0
    %v1138 = vmax.f32 %v1126, 0.0
    %v1139 = vmax.f32 %v1129, 0.0
    %v1140 = vmul.f32 %v1132, %v1132
    %v1141 = vmul.f32 %v1133, %v1133
    %v1142 = vmul.f32 %v1134, %v1134
    %v1143 = vmul.f32 %v1135, %v1135
    %v1144 = vmul.f32 %v1136, %v1136
    %v1145 = vmul.f32 %v1137, %v1137
    %v1146 = vmul.f32 %v1138, %v1138
    %v1147 = vmul.f32 %v1139, %v1139
    %1148 = vadd.xlane.f32.xlu0 %v1140
    %v1149 = vpop.xlane.xlu0 %1148
    %1150 = vadd.xlane.f32.xlu0 %v1141
    %v1151 = vpop.xlane.xlu0 %1150
    %1152 = vadd.xlane.f32.xlu0 %v1142
    %v1153 = vpop.xlane.xlu0 %1152
    %1154 = vadd.xlane.f32.xlu0 %v1143
    %v1155 = vpop.xlane.xlu0 %1154
    %1156 = vadd.xlane.f32.xlu0 %v1144
    %v1157 = vpop.xlane.xlu0 %1156
    %1158 = vadd.xlane.f32.xlu0 %v1145
    %v1159 = vpop.xlane.xlu0 %1158
    %1160 = vadd.xlane.f32.xlu0 %v1146
    %v1161 = vpop.xlane.xlu0 %1160
    %1162 = vadd.xlane.f32.xlu0 %v1147
    %v1163 = vpop.xlane.xlu0 %1162
    %v1164 = vmax.f32 %v1149, 1e-24
    %v1165 = vmax.f32 %v1151, 1e-24
    %v1166 = vmax.f32 %v1153, 1e-24
    %v1167 = vmax.f32 %v1155, 1e-24
    %v1168 = vmax.f32 %v1157, 1e-24
    %v1169 = vmax.f32 %v1159, 1e-24
    %v1170 = vmax.f32 %v1161, 1e-24
    %v1171 = vmax.f32 %v1163, 1e-24
    %v1172 = vrsqrt.pop %v1164
    %v1173 = vrsqrt.pop %v1165
    %v1174 = vrsqrt.pop %v1166
    %v1175 = vrsqrt.pop %v1167
    %v1176 = vrsqrt.pop %v1168
    %v1177 = vrsqrt.pop %v1169
    %v1178 = vrsqrt.pop %v1170
    %v1179 = vrsqrt.pop %v1171
    %v1180 = vmul.f32 %v1132, %v1172
    %v1181 = vmul.f32 %v1133, %v1173
    %v1182 = vmul.f32 %v1134, %v1174
    %v1183 = vmul.f32 %v1135, %v1175
    %v1184 = vmul.f32 %v1136, %v1176
    %v1185 = vmul.f32 %v1137, %v1177
    %v1186 = vmul.f32 %v1138, %v1178
    %v1187 = vmul.f32 %v1139, %v1179
    %v1188 = vadd.f32 %v1180, %v650
    %v1189 = vadd.f32 %v1181, %v651
    %v1190 = vadd.f32 %v1182, %v652
    %v1191 = vadd.f32 %v1183, %v653
    %v1192 = vadd.f32 %v1184, %v654
    %v1193 = vadd.f32 %v1185, %v655
    %v1194 = vadd.f32 %v1186, %v656
    %v1195 = vadd.f32 %v1187, %v657
    %v1196 = vmax.f32 %v1188, 0.0
    %v1197 = vmax.f32 %v1189, 0.0
    %v1198 = vmax.f32 %v1190, 0.0
    %v1199 = vmax.f32 %v1191, 0.0
    %v1200 = vmax.f32 %v1192, 0.0
    %v1201 = vmax.f32 %v1193, 0.0
    %v1202 = vmax.f32 %v1194, 0.0
    %v1203 = vmax.f32 %v1195, 0.0
    %v1204 = vmul.f32 %v1196, %v1196
    %v1205 = vmul.f32 %v1197, %v1197
    %v1206 = vmul.f32 %v1198, %v1198
    %v1207 = vmul.f32 %v1199, %v1199
    %v1208 = vmul.f32 %v1200, %v1200
    %v1209 = vmul.f32 %v1201, %v1201
    %v1210 = vmul.f32 %v1202, %v1202
    %v1211 = vmul.f32 %v1203, %v1203
    %1212 = vadd.xlane.f32.xlu0 %v1204
    %v1213 = vpop.xlane.xlu0 %1212
    %1214 = vadd.xlane.f32.xlu0 %v1205
    %v1215 = vpop.xlane.xlu0 %1214
    %1216 = vadd.xlane.f32.xlu0 %v1206
    %v1217 = vpop.xlane.xlu0 %1216
    %1218 = vadd.xlane.f32.xlu0 %v1207
    %v1219 = vpop.xlane.xlu0 %1218
    %1220 = vadd.xlane.f32.xlu0 %v1208
    %v1221 = vpop.xlane.xlu0 %1220
    %1222 = vadd.xlane.f32.xlu0 %v1209
    %v1223 = vpop.xlane.xlu0 %1222
    %1224 = vadd.xlane.f32.xlu0 %v1210
    %v1225 = vpop.xlane.xlu0 %1224
    %1226 = vadd.xlane.f32.xlu0 %v1211
    %v1227 = vpop.xlane.xlu0 %1226
    %v1228 = vmax.f32 %v1213, 1e-24
    %v1229 = vmax.f32 %v1215, 1e-24
    %v1230 = vmax.f32 %v1217, 1e-24
    %v1231 = vmax.f32 %v1219, 1e-24
    %v1232 = vmax.f32 %v1221, 1e-24
    %v1233 = vmax.f32 %v1223, 1e-24
    %v1234 = vmax.f32 %v1225, 1e-24
    %v1235 = vmax.f32 %v1227, 1e-24
    %v1236 = vrsqrt.pop %v1228
    %v1237 = vrsqrt.pop %v1229
    %v1238 = vrsqrt.pop %v1230
    %v1239 = vrsqrt.pop %v1231
    %v1240 = vrsqrt.pop %v1232
    %v1241 = vrsqrt.pop %v1233
    %v1242 = vrsqrt.pop %v1234
    %v1243 = vrsqrt.pop %v1235
    %v1244 = vmul.f32 %v1196, %v1236
    %v1245 = vmul.f32 %v1197, %v1237
    %v1246 = vmul.f32 %v1198, %v1238
    %v1247 = vmul.f32 %v1199, %v1239
    %v1248 = vmul.f32 %v1200, %v1240
    %v1249 = vmul.f32 %v1201, %v1241
    %v1250 = vmul.f32 %v1202, %v1242
    %v1251 = vmul.f32 %v1203, %v1243
    %1252 = vst [vmem:[#allocation8] sm:$0xff] %v1244
    %1253 = vst [vmem:[#allocation8 + $0x8] sm:$0xff] %v1245
    %1254 = vst [vmem:[#allocation8 + $0x10] sm:$0xff] %v1246
    %1255 = vst [vmem:[#allocation8 + $0x18] sm:$0xff] %v1247
    %1256 = vst [vmem:[#allocation8 + $0x20] sm:$0xff] %v1248
    %1257 = vst [vmem:[#allocation8 + $0x28] sm:$0xff] %v1249
    %1258 = vst [vmem:[#allocation8 + $0x30] sm:$0xff] %v1250
    %1259 = vst [vmem:[#allocation8 + $0x38] sm:$0xff] %v1251
    // Predicated region
    $region30: #{tpu_custom_call.1} parent=1 // pred_check
      _
    $region31: #{tpu_custom_call.1} parent=1 // pred_check_branch
      %1261 = sbr.rel (0) target = $region33
    $region32: #{tpu_custom_call.1} parent=1 // pred_region
      %s1263 = ssub.s32 1024, 1024
      %1264 = vsyncadd [#allocation4], %s1263
      %s1265 = sshll.u32 [#allocation8], 4
      %s1266 = int_to_ptr.vmem [resolvable:$true] %s1265
      %1271 = dma.vmem_to_hbm [thread:$0]  %s1266, 1024, %s4, [#allocation4], 128, 128, 8
    $region33: #{tpu_custom_call.1} parent=1 // pred_fallthru
      _
    // Predicated region
    $region34: #{tpu_custom_call.1} parent=1 // pred_check
      _
    $region35: #{tpu_custom_call.1} parent=1 // pred_check_branch
      %1273 = sbr.rel (0) target = $region37
    $region36: #{tpu_custom_call.1} parent=1 // pred_region
      %1274 = dma.done [#allocation4], 1024
    $region37: #{tpu_custom_call.1} parent=1 // pred_fallthru
      _
    %1275 = vsyncpa [#allocation3], 1
    %1276 = vsyncpa [#allocation6], 1
    %1277 = vsyncpa [#allocation4], 1

</llo_original>
